<compile_context>
chip_gen: v7x
topology: tpu7x:2x2x1
jax: 0.10.0
libtpu: 0.0.40
codegen_flags: <defaults>
</compile_context>

<pallas_src>
import functools

import jax
import jax.numpy as jnp
from jax.experimental import pallas as pl
from jax.experimental.pallas import tpu as pltpu


# ---------------------------------------------------------------------------
# Model hyper-parameters (small, consistent with a NeRF-style MLP).
# ---------------------------------------------------------------------------
POS_DIM = 24           # positionally-encoded xyz features
DIR_DIM = 12           # positionally-encoded view-direction features
D_IN = POS_DIM + DIR_DIM          # 36
HIDDEN = 32
WPAD = 40              # padded state width (sublane axis in the kernel):
                       #   0:32 hidden | 32:35 dir->rgb carry | 36 const-one
CONST = D_IN           # index 36: constant-one bias-carry row
N_ROWS = 256           # number of samples in the example input
MAX_ROW_TILE = 512     # sample tile (lane axis) for large N


# ---------------------------------------------------------------------------
# Pallas kernel: full fused NeRF-MLP forward over one sample tile, transposed.
#
# x_ref : (WPAD, T) bf16   augmented input  (rows 0:36 = x.T, row 36 = 1)
# w_ref : (3, WPAD, WPAD) bf16  stacked TRANSPOSED layer matrices (biases folded)
# state : (WPAD, T) f32    rows 0:32 hidden | 32:35 dir carry | 36 const 1
# head  : rows 0:3 rgb pre-sigmoid, row 3 sigma, rest zero
# ---------------------------------------------------------------------------
def _cascade_mlp_kernel(x_ref, w_ref, *rest, sigma_only, has_noise):
    if has_noise:
        noise_ref, out_ref = rest
    else:
        (out_ref,) = rest

    x = x_ref[...]                                   # (WPAD, T) bf16
    w1t = w_ref[0]                                   # (WPAD, WPAD) bf16
    w2t = w_ref[1]
    w3t = w_ref[2]

    cols = x.shape[1]
    sub = jax.lax.broadcasted_iota(jnp.int32, (WPAD, cols), 0)
    hidden_mask = sub < HIDDEN                       # relu only on hidden rows

    # Layer 1 (also produces dir->rgb carry rows 32:35 and keeps const row 36).
    t = jnp.dot(w1t, x, preferred_element_type=jnp.float32)
    t = jnp.where(hidden_mask, jnp.maximum(t, 0.0), t)

    # Layer 2 (identity block passes carry + const through untouched).
    t = jnp.dot(w2t, t.astype(w2t.dtype), preferred_element_type=jnp.float32)
    t = jnp.where(hidden_mask, jnp.maximum(t, 0.0), t)

    # Fused head: rows 0:3 = rgb pre-activation, row 3 = sigma (biases folded).
    head = jnp.dot(w3t, t.astype(w3t.dtype), preferred_element_type=jnp.float32)

    if has_noise:
        head = jnp.where(sub == 3, head + noise_ref[...], head)

    if sigma_only:
        out_ref[...] = head[3:4, :].astype(out_ref.dtype)
    else:
        out = jnp.where(sub < 3, jax.nn.sigmoid(head), head)
        out_ref[...] = out[0:4, :].astype(out_ref.dtype)


# ---------------------------------------------------------------------------
# Wrapper: layout plumbing (transpose + const row), specs, pallas_call.
# ---------------------------------------------------------------------------
def _nerf_forward(w_slab, x, sigma_only, sigma_noise):
    n, d_in = x.shape
    assert d_in == D_IN

    if n <= MAX_ROW_TILE:
        row_tile = n
    else:
        assert n % MAX_ROW_TILE == 0, "pad N to a multiple of MAX_ROW_TILE"
        row_tile = MAX_ROW_TILE
    grid = (n // row_tile,)

    has_noise = sigma_noise is not None
    out_dim = 1 if sigma_only else 4

    # Lane-dense layout: samples along the 128-lane axis; append const-one row
    # that folds all biases into the weight slab.  Pure layout plumbing.
    x_t = jnp.zeros((WPAD, n), jnp.bfloat16)
    x_t = x_t.at[:D_IN, :].set(x.T.astype(jnp.bfloat16))
    x_t = x_t.at[CONST, :].set(jnp.bfloat16(1.0))

    in_specs = [
        pl.BlockSpec((WPAD, row_tile), lambda i: (0, i)),          # x tile
        pl.BlockSpec((3, WPAD, WPAD), lambda i: (0, 0, 0)),        # weight slab
    ]
    args = [x_t, w_slab]
    if has_noise:
        noise_t = sigma_noise.reshape(1, n).astype(jnp.float32)
        in_specs.append(pl.BlockSpec((1, row_tile), lambda i: (0, i)))
        args.append(noise_t)

    kernel = functools.partial(
        _cascade_mlp_kernel, sigma_only=sigma_only, has_noise=has_noise)

    out_t = pl.pallas_call(
        kernel,
        out_shape=jax.ShapeDtypeStruct((out_dim, n), jnp.float32),
        grid=grid,
        in_specs=in_specs,
        out_specs=pl.BlockSpec((out_dim, row_tile), lambda i: (0, i)),
        compiler_params=pltpu.CompilerParams(
            dimension_semantics=("parallel",)),
    )(*args)
    return out_t.T                        # restore module's (N, out_dim) layout


# ---------------------------------------------------------------------------
# Parameter construction (deterministic), packing, and the Cascade wrapper.
# ---------------------------------------------------------------------------
def _make_mlp_params(key):
    ks = jax.random.split(key, 9)
    scale = 0.1
    w1 = scale * jax.random.normal(ks[0], (POS_DIM, HIDDEN), jnp.float32)
    b1 = scale * jax.random.normal(ks[1], (1, HIDDEN), jnp.float32)
    w2 = scale * jax.random.normal(ks[2], (HIDDEN, HIDDEN), jnp.float32)
    b2 = scale * jax.random.normal(ks[3], (1, HIDDEN), jnp.float32)
    wsig = scale * jax.random.normal(ks[4], (HIDDEN, 1), jnp.float32)
    bsig = scale * jax.random.normal(ks[5], (1, 1), jnp.float32)
    wrgb_h = scale * jax.random.normal(ks[6], (HIDDEN, 3), jnp.float32)
    wrgb_d = scale * jax.random.normal(ks[7], (DIR_DIM, 3), jnp.float32)
    brgb = scale * jax.random.normal(ks[8], (1, 3), jnp.float32)
    return (w1, b1, w2, b2, wsig, bsig, wrgb_h, wrgb_d, brgb)


def _pack_params(raw):
    """Pack the 9 raw tensors into one (3, WPAD, WPAD) bf16 transposed slab.

    Biases are folded via the constant-one carry at index CONST; the dir->rgb
    contribution is carried through identity blocks in cols 32:35.
    """
    w1, b1, w2, b2, wsig, bsig, wrgb_h, wrgb_d, brgb = raw

    W1 = jnp.zeros((WPAD, WPAD), jnp.float32)
    W1 = W1.at[:POS_DIM, :HIDDEN].set(w1)                       # pos -> hidden
    W1 = W1.at[POS_DIM:D_IN, HIDDEN:HIDDEN + 3].set(wrgb_d)     # dir -> rgb carry
    W1 = W1.at[CONST, :HIDDEN].set(b1.reshape(-1))              # bias fold
    W1 = W1.at[CONST, CONST].set(1.0)                           # keep const = 1

    W2 = jnp.zeros((WPAD, WPAD), jnp.float32)
    W2 = W2.at[:HIDDEN, :HIDDEN].set(w2)
    W2 = W2.at[HIDDEN:HIDDEN + 3, HIDDEN:HIDDEN + 3].set(
        jnp.eye(3, dtype=jnp.float32))                          # carry pass-through
    W2 = W2.at[CONST, :HIDDEN].set(b2.reshape(-1))
    W2 = W2.at[CONST, CONST].set(1.0)

    W3 = jnp.zeros((WPAD, WPAD), jnp.float32)
    W3 = W3.at[:HIDDEN, 0:3].set(wrgb_h)                        # hidden -> rgb
    W3 = W3.at[:HIDDEN, 3:4].set(wsig)                          # hidden -> sigma
    W3 = W3.at[HIDDEN:HIDDEN + 3, 0:3].set(
        jnp.eye(3, dtype=jnp.float32))                          # dir carry -> rgb
    W3 = W3.at[CONST, 0:3].set(brgb.reshape(-1))
    W3 = W3.at[CONST, 3].set(bsig[0, 0])

    # Kernel computes state_t = W.T @ state_t, so stack the transposes.
    w_slab = jnp.stack([W1.T, W2.T, W3.T], axis=0).astype(jnp.bfloat16)
    return w_slab


class Cascade:
    """Coarse/fine cascade: pure static dispatch, mirroring the PyTorch module."""

    def __init__(self, coarse_raw_params, fine_raw_params):
        self.coarse = _pack_params(coarse_raw_params)
        self.fine = _pack_params(fine_raw_params)

    def __call__(self, use_coarse, x, sigma_only=False, sigma_noise=None):
        w_slab = self.coarse if use_coarse else self.fine
        return _nerf_forward(w_slab, x, sigma_only, sigma_noise)


# ---------------------------------------------------------------------------
# Pure-JAX f32 reference (for a loose bf16-tolerance sanity check).
# ---------------------------------------------------------------------------
def _reference(raw, x, sigma_only, sigma_noise):
    w1, b1, w2, b2, wsig, bsig, wrgb_h, wrgb_d, brgb = raw
    xyz, xdir = x[:, :POS_DIM], x[:, POS_DIM:]
    h = jnp.maximum(xyz @ w1 + b1, 0.0)
    h = jnp.maximum(h @ w2 + b2, 0.0)
    sigma = h @ wsig + bsig
    if sigma_noise is not None:
        sigma = sigma + sigma_noise.reshape(-1, 1)
    if sigma_only:
        return sigma
    rgb = jax.nn.sigmoid(h @ wrgb_h + xdir @ wrgb_d + brgb)
    return jnp.concatenate([rgb, sigma], axis=-1)


if __name__ == "__main__":
    root = jax.random.PRNGKey(0)
    k_coarse, k_fine, k_x, k_noise = jax.random.split(root, 4)

    raw_coarse = _make_mlp_params(k_coarse)
    raw_fine = _make_mlp_params(k_fine)
    cascade = Cascade(raw_coarse, raw_fine)

    x = jax.random.normal(k_x, (N_ROWS, D_IN), jnp.float32)
    noise = 0.01 * jax.random.normal(k_noise, (N_ROWS, 1), jnp.float32)

    # use_coarse=True branch: full [rgb | sigma] output, no noise.
    out_coarse = cascade(True, x)
    # use_coarse=False branch: sigma_only with additive sigma noise.
    out_fine_sigma = cascade(False, x, sigma_only=True, sigma_noise=noise)

    jax.block_until_ready(out_coarse)
    jax.block_until_ready(out_fine_sigma)

    assert out_coarse.shape == (N_ROWS, 4)
    assert out_fine_sigma.shape == (N_ROWS, 1)

    ref_coarse = _reference(raw_coarse, x, False, None)
    ref_fine = _reference(raw_fine, x, True, noise)
    err_c = float(jnp.max(jnp.abs(out_coarse - ref_coarse)))
    err_f = float(jnp.max(jnp.abs(out_fine_sigma - ref_fine)))
    assert err_c < 5e-2 and err_f < 5e-2, (err_c, err_f)

    print("KERNEL_OK")
</pallas_src>

<mosaic_0001>
module attributes {stable_mosaic.version = 11 : i64} {
  func.func @_cascade_mlp_kernel(%arg0: i32, %arg1: memref<40x256xbf16, #tpu.memory_space<vmem>>, %arg2: memref<3x40x40xbf16, #tpu.memory_space<vmem>>, %arg3: memref<4x256xf32, #tpu.memory_space<vmem>>) attributes {dimension_semantics = [#tpu.dimension_semantics<parallel>], iteration_bounds = array<i64: 1>, scalar_prefetch = 0 : i64, scratch_operands = 0 : i64, tpu.core_type = #tpu.core_type<tc>, window_params = [{transform_indices = @transform_0, window_bounds = array<i64: 40, 256>}, {pipeline_mode = #tpu.pipeline_mode<synchronous>, transform_indices = @transform_1, window_bounds = array<i64: 3, 40, 40>}, {transform_indices = @transform_2, window_bounds = array<i64: 4, 256>}]} {
    %c0 = arith.constant 0 : index
    %c0_0 = arith.constant 0 : index
    %0 = vector.load %arg1[%c0, %c0_0] : memref<40x256xbf16, #tpu.memory_space<vmem>>, vector<40x256xbf16>
    %c0_1 = arith.constant 0 : index
    %c0_2 = arith.constant 0 : index
    %c0_3 = arith.constant 0 : index
    %1 = vector.load %arg2[%c0_1, %c0_2, %c0_3] : memref<3x40x40xbf16, #tpu.memory_space<vmem>>, vector<1x40x40xbf16>
    %2 = vector.shape_cast %1 : vector<1x40x40xbf16> to vector<40x40xbf16>
    %c1 = arith.constant 1 : index
    %c0_4 = arith.constant 0 : index
    %c0_5 = arith.constant 0 : index
    %3 = vector.load %arg2[%c1, %c0_4, %c0_5] : memref<3x40x40xbf16, #tpu.memory_space<vmem>>, vector<1x40x40xbf16>
    %4 = vector.shape_cast %3 : vector<1x40x40xbf16> to vector<40x40xbf16>
    %c2 = arith.constant 2 : index
    %c0_6 = arith.constant 0 : index
    %c0_7 = arith.constant 0 : index
    %5 = vector.load %arg2[%c2, %c0_6, %c0_7] : memref<3x40x40xbf16, #tpu.memory_space<vmem>>, vector<1x40x40xbf16>
    %6 = vector.shape_cast %5 : vector<1x40x40xbf16> to vector<40x40xbf16>
    %7 = tpu.iota {dimensions = array<i32: 0>} : vector<40x256xi32>
    %c32_i32 = arith.constant 32 : i32
    %8 = vector.broadcast %c32_i32 : i32 to vector<40x256xi32>
    %9 = arith.cmpi slt, %7, %8 : vector<40x256xi32>
    %cst = arith.constant dense<0.000000e+00> : vector<40x256xf32>
    %10 = tpu.matmul %2, %0, %cst {dimension_numbers = #tpu.dot_dimension_numbers<[1], [0], [0], [1], [0, 0, 1, 1], [], []>} : vector<40x40xbf16>, vector<40x256xbf16>, vector<40x256xf32> -> vector<40x256xf32>
    %cst_8 = arith.constant 0.000000e+00 : f32
    %11 = vector.broadcast %cst_8 : f32 to vector<40x256xf32>
    %12 = arith.maximumf %10, %11 : vector<40x256xf32>
    %13 = arith.select %9, %12, %10 : vector<40x256xi1>, vector<40x256xf32>
    %14 = arith.truncf %13 : vector<40x256xf32> to vector<40x256xbf16>
    %cst_9 = arith.constant dense<0.000000e+00> : vector<40x256xf32>
    %15 = tpu.matmul %4, %14, %cst_9 {dimension_numbers = #tpu.dot_dimension_numbers<[1], [0], [0], [1], [0, 0, 1, 1], [], []>} : vector<40x40xbf16>, vector<40x256xbf16>, vector<40x256xf32> -> vector<40x256xf32>
    %cst_10 = arith.constant 0.000000e+00 : f32
    %16 = vector.broadcast %cst_10 : f32 to vector<40x256xf32>
    %17 = arith.maximumf %15, %16 : vector<40x256xf32>
    %18 = arith.select %9, %17, %15 : vector<40x256xi1>, vector<40x256xf32>
    %19 = arith.truncf %18 : vector<40x256xf32> to vector<40x256xbf16>
    %cst_11 = arith.constant dense<0.000000e+00> : vector<40x256xf32>
    %20 = tpu.matmul %6, %19, %cst_11 {dimension_numbers = #tpu.dot_dimension_numbers<[1], [0], [0], [1], [0, 0, 1, 1], [], []>} : vector<40x40xbf16>, vector<40x256xbf16>, vector<40x256xf32> -> vector<40x256xf32>
    %c3_i32 = arith.constant 3 : i32
    %21 = vector.broadcast %c3_i32 : i32 to vector<40x256xi32>
    %22 = arith.cmpi slt, %7, %21 : vector<40x256xi32>
    %23 = arith.negf %20 : vector<40x256xf32>
    %24 = math.exp %23 : vector<40x256xf32>
    %cst_12 = arith.constant 1.000000e+00 : f32
    %25 = vector.broadcast %cst_12 : f32 to vector<40x256xf32>
    %26 = arith.addf %25, %24 : vector<40x256xf32>
    %27 = arith.divf %25, %26 : vector<40x256xf32>
    %28 = arith.select %22, %27, %20 : vector<40x256xi1>, vector<40x256xf32>
    %29 = vector.extract_strided_slice %28 {offsets = [0, 0], sizes = [4, 256], strides = [1, 1]} : vector<40x256xf32> to vector<4x256xf32>
    %c0_13 = arith.constant 0 : index
    %c0_14 = arith.constant 0 : index
    %30 = vector.load %arg3[%c0_13, %c0_14] : memref<4x256xf32, #tpu.memory_space<vmem>>, vector<4x256xf32>
    tpu.vector_store %arg3[%c0_13, %c0_14], %29 {strides = array<i32>} : memref<4x256xf32, #tpu.memory_space<vmem>>, vector<4x256xf32>,
    return
  }
  func.func @transform_0(%arg0: i32) -> (i32, i32) {
    %c0_i32 = arith.constant 0 : i32
    %c0_i32_0 = arith.constant 0 : i32
    return %c0_i32, %arg0 : i32, i32
  }
  func.func @transform_1(%arg0: i32) -> (i32, i32, i32) {
    %c0_i32 = arith.constant 0 : i32
    %c0_i32_0 = arith.constant 0 : i32
    %c0_i32_1 = arith.constant 0 : i32
    %c0_i32_2 = arith.constant 0 : i32
    return %c0_i32, %c0_i32_0, %c0_i32_1 : i32, i32, i32
  }
  func.func @transform_2(%arg0: i32) -> (i32, i32) {
    %c0_i32 = arith.constant 0 : i32
    %c0_i32_0 = arith.constant 0 : i32
    return %c0_i32, %arg0 : i32, i32
  }
}

</mosaic_0001>

<llo_original>
// kernel: tpu_custom_call.1
$region0: #{tpu_custom_call.1}
  #allocation0 [shape = 'u32[]', space=smem, size = 0x4, offset = 0x4, fixed_abs, tag = 'smem constant byte address 0x4 - core index']
  #allocation1 [shape = 'u32[144,128]{1,0:T(1,128)}', space=vmem, size = 0x12000, scoped, tag = 'internal scratch']
  %s0 = inlined_call_operand.hbm [shape: bf16[40,256], index: 0, kind: input, shape index: {}]
  %s1 = inlined_call_operand.hbm [shape: bf16[3,40,40], index: 1, kind: input, shape index: {}]
  %s2 = inlined_call_operand.hbm [shape: f32[4,256], index: 2, kind: output, shape index: {}]
  %s3 = sld [smem:[#allocation0]]
  $region26: #{tpu_custom_call.1} parent=0
    _
  %s5 = ssub.s32 1, %s3
  %s6 = scalar_select 0, %s5, %s3
  $region1: #{tpu_custom_call.1} parent=0
    #allocation2 [shape = 'u8[20480]{0}', space=vmem, size = 0x5000, scoped, tag = 'input window, operand 0, single buffered']
    #allocation3 [shape = 's32[1]{0}', space=sflag, size = 0x4, scoped, tag = 'scoped memory for tpu_custom_call.1']
    #allocation4 [shape = 's32[1]{0}', space=sflag, size = 0x4, scoped, tag = 'scoped memory for tpu_custom_call.1']
    #allocation5 [shape = 'u8[30720]{0}', space=vmem, size = 0x7800, scoped, tag = 'input window, operand 1, single buffered']
    #allocation6 [shape = 's32[1]{0}', space=sflag, size = 0x4, scoped, tag = 'scoped memory for tpu_custom_call.1']
    #allocation7 [shape = 'u8[4096]{0}', space=vmem, size = 0x1000, scoped, tag = 'output window, operand 0, single buffered']
    %7 = vsyncpa [#allocation3], 0
    %8 = vsyncpa [#allocation6], 0
    %9 = vsyncpa [#allocation4], 0
    // Predicated region
    $region2: #{tpu_custom_call.1} parent=1 // pred_check
      _
    $region3: #{tpu_custom_call.1} parent=1 // pred_check_branch
      %11 = sbr.rel (0) target = $region5
    $region4: #{tpu_custom_call.1} parent=1 // pred_region
      %s13 = ssub.s32 640, 640
      %14 = vsyncadd [#allocation3], %s13
      %s15 = sshll.u32 [#allocation2], 4
      %s16 = int_to_ptr.vmem [resolvable:$true] %s15
      %21 = dma.hbm_to_vmem [thread:$0]  %s0, 640, %s16, [#allocation3], 128, 128, 8
    $region5: #{tpu_custom_call.1} parent=1 // pred_fallthru
      _
    // Predicated region
    $region6: #{tpu_custom_call.1} parent=1 // pred_check
      _
    $region7: #{tpu_custom_call.1} parent=1 // pred_check_branch
      %23 = sbr.rel (0) target = $region9
    $region8: #{tpu_custom_call.1} parent=1 // pred_region
      %s25 = ssub.s32 960, 960
      %26 = vsyncadd [#allocation6], %s25
      %s27 = sshll.u32 [#allocation5], 4
      %s28 = int_to_ptr.vmem [resolvable:$true] %s27
      %33 = dma.hbm_to_vmem [thread:$0]  %s1, 960, %s28, [#allocation6], 64, 64, 4
    $region9: #{tpu_custom_call.1} parent=1 // pred_fallthru
      _
    // Predicated region
    $region10: #{tpu_custom_call.1} parent=1 // pred_check
      _
    $region11: #{tpu_custom_call.1} parent=1 // pred_check_branch
      %35 = sbr.rel (0) target = $region13
    $region12: #{tpu_custom_call.1} parent=1 // pred_region
      %36 = dma.done [#allocation3], 640
    $region13: #{tpu_custom_call.1} parent=1 // pred_fallthru
      _
    // Predicated region
    $region14: #{tpu_custom_call.1} parent=1 // pred_check
      _
    $region15: #{tpu_custom_call.1} parent=1 // pred_check_branch
      %38 = sbr.rel (0) target = $region17
    $region16: #{tpu_custom_call.1} parent=1 // pred_region
      %39 = dma.done [#allocation6], 960
    $region17: #{tpu_custom_call.1} parent=1 // pred_fallthru
      _
    %v41 = vld [vmem:[#allocation2] sm:$0xff]
    %v42 = vld [vmem:[#allocation2 + $0x8] sm:$0xff]
    %v43 = vld [vmem:[#allocation2 + $0x10] sm:$0xff]
    %v44 = vld [vmem:[#allocation2 + $0x18] sm:$0xff]
    %v45 = vld [vmem:[#allocation2 + $0x20] sm:$0xff]
    %v46 = vld [vmem:[#allocation5] sm:$0xf]
    %v47 = vld [vmem:[#allocation5 + $0x4] sm:$0xf]
    %v48 = vld [vmem:[#allocation5 + $0x8] sm:$0xf]
    %v49 = vld [vmem:[#allocation5 + $0xc] sm:$0xf]
    %v50 = vld [vmem:[#allocation5 + $0x10] sm:$0xf]
    %s51 = scalar_lea.vmem [#allocation5], 20
    %v52 = vld [vmem:[%s51] sm:$0xf]
    %v53 = vld [vmem:[%s51 + $0x4] sm:$0xf]
    %v54 = vld [vmem:[%s51 + $0x8] sm:$0xf]
    %v55 = vld [vmem:[%s51 + $0xc] sm:$0xf]
    %v56 = vld [vmem:[%s51 + $0x10] sm:$0xf]
    %s57 = scalar_lea.vmem [#allocation5], 40
    %v58 = vld [vmem:[%s57] sm:$0xf]
    %v59 = vld [vmem:[%s57 + $0x4] sm:$0xf]
    %v60 = vld [vmem:[%s57 + $0x8] sm:$0xf]
    %v61 = vld [vmem:[%s57 + $0xc] sm:$0xf]
    %v62 = vld [vmem:[%s57 + $0x10] sm:$0xf]
    %v63 = vlaneseq
    %v64 = vshrl.u32 %v63, 7
    %v65 = vadd.s32 %v64, 8
    %v66 = vadd.s32 %v64, 16
    %v67 = vadd.s32 %v64, 24
    %v68 = vadd.s32 %v64, 32
    %vm69 = vcmp.lt.s32.totalorder %v64, 32
    %vm70 = vcmp.lt.s32.totalorder %v65, 32
    %vm71 = vcmp.lt.s32.totalorder %v66, 32
    %vm72 = vcmp.lt.s32.totalorder %v67, 32
    %vm73 = vcmp.lt.s32.totalorder %v68, 32
    %v79 = vunpack.c.l.b16 %v46
    %v80 = vunpack.c.l.b16 %v47
    %v81 = vunpack.c.l.b16 %v48
    %v82 = vunpack.c.l.b16 %v49
    %v83 = vunpack.c.l.b16 %v50
    %v84 = vpack.c.b16 %v80, %v79
    %v85 = vpack.c.b16 %v82, %v81
    %v86 = vpack.c.b16 %v83, %v83
    %v92 = vunpack.c.l.b16 %v41
    %v93 = vunpack.c.h.b16 %v41
    %v94 = vunpack.c.l.b16 %v42
    %v95 = vunpack.c.h.b16 %v42
    %v96 = vunpack.c.l.b16 %v43
    %v97 = vunpack.c.h.b16 %v43
    %v98 = vunpack.c.l.b16 %v44
    %v99 = vunpack.c.h.b16 %v44
    %v100 = vunpack.c.l.b16 %v45
    %v101 = vunpack.c.h.b16 %v45
    %v102 = vpack.c.b16 %v94, %v92
    %v103 = vpack.c.b16 %v95, %v93
    %v104 = vpack.c.b16 %v98, %v96
    %v105 = vpack.c.b16 %v99, %v97
    %v106 = vpack.c.b16 %v100, %v100
    %v107 = vpack.c.b16 %v101, %v101
    %vm112 = vcmask 326656
    %v114 = vsel %vm112, %v84, 0
    %v117 = vsel %vm112, %v85, 0
    %v120 = vsel %vm112, %v86, 0
    %vm122 = vcmask 1043456
    %v124 = vsel %vm122, %v106, 0
    %v127 = vsel %vm122, %v107, 0
    %129 = vmatprep.subr.bf16.mxu0 %v103
    %130 = vmatpush1.bf16.msra.mxu0 %v102
    %131 = vmatprep.subr.bf16.mxu0 %v105
    %132 = vmatpush1.bf16.msra.mxu0 %v104
    %133 = vmatprep.subr.bf16.mxu0 %v127
    %134 = vmatpush1.bf16.msra.mxu0 %v124
    %135 = vmatprep.subr.bf16.mxu0 0
    %136 = vmatpush1.bf16.msra.mxu0 0
    %137 = vmatprep.subr.bf16.mxu0 0
    %138 = vmatpush1.bf16.msra.mxu0 0
    %139 = vmatprep.subr.bf16.mxu0 0
    %140 = vmatpush1.bf16.msra.mxu0 0
    %141 = vmatprep.subr.bf16.mxu0 0
    %142 = vmatpush1.bf16.msra.mxu0 0
    %143 = vmatprep.subr.bf16.mxu0 0
    %144 = vmatpush1.bf16.msra.mxu0 0
    %145 = vmatprep.subr.bf16.mxu0 0
    %146 = vmatpush1.bf16.msra.mxu0 0
    %147 = vmatprep.subr.bf16.mxu0 0
    %148 = vmatpush1.bf16.msra.mxu0 0
    %149 = vmatprep.subr.bf16.mxu0 0
    %150 = vmatpush1.bf16.msra.mxu0 0
    %151 = vmatprep.subr.bf16.mxu0 0
    %152 = vmatpush1.bf16.msra.mxu0 0
    %153 = vmatprep.subr.bf16.mxu0 0
    %154 = vmatpush1.bf16.msra.mxu0 0
    %155 = vmatprep.subr.bf16.mxu0 0
    %156 = vmatpush1.bf16.msra.mxu0 0
    %157 = vmatprep.subr.bf16.mxu0 0
    %158 = vmatpush1.bf16.msra.mxu0 0
    %159 = vmatprep.subr.bf16.mxu0 0
    %160 = vmatpush1.bf16.msra.mxu0 0
    %161 = vmatprep.mubr.bf16.mxu0 0
    %162 = vmatmul.mubr.bf16.gmra.mrb[0].mxu0 %v114
    %v163 = vpop.f32.mrb[0].mxu0
    %v164 = vadd.f32 0.0, %v163
    %v165 = vpop.f32.mrb[0].mxu0
    %v166 = vadd.f32 0.0, %v165
    %v167 = vpop.f32.mrb[0].mxu0
    %v168 = vadd.f32 0.0, %v167
    %v169 = vpop.f32.mrb[0].mxu0
    %v170 = vadd.f32 0.0, %v169
    %171 = vmatprep.mubr.bf16.mxu0 0
    %172 = vmatmul.mubr.bf16.gmra.mrb[0].mxu0 %v117
    %v173 = vpop.f32.mrb[0].mxu0
    %v174 = vadd.f32 0.0, %v173
    %v175 = vpop.f32.mrb[0].mxu0
    %v176 = vadd.f32 0.0, %v175
    %v177 = vpop.f32.mrb[0].mxu0
    %v178 = vadd.f32 0.0, %v177
    %v179 = vpop.f32.mrb[0].mxu0
    %v180 = vadd.f32 0.0, %v179
    %181 = vmatprep.mubr.bf16.mxu0 0
    %182 = vmatmul.mubr.bf16.gmra.mrb[0].mxu0 %v120
    %v183 = vpop.f32.mrb[0].mxu0
    %v184 = vadd.f32 0.0, %v183
    %v185 = vpop.f32.mrb[0].mxu0
    %v186 = vadd.f32 0.0, %v185
    %v187 = vpop.f32.mrb[0].mxu0
    %v188 = vpop.f32.mrb[0].mxu0
    %189 = vdwg.mxu0
    %v190 = vmax.f32 %v164, 0.0
    %v191 = vmax.f32 %v166, 0.0
    %v192 = vmax.f32 %v168, 0.0
    %v193 = vmax.f32 %v170, 0.0
    %v194 = vmax.f32 %v174, 0.0
    %v195 = vmax.f32 %v176, 0.0
    %v196 = vmax.f32 %v178, 0.0
    %v197 = vmax.f32 %v180, 0.0
    %v198 = vmax.f32 %v184, 0.0
    %v199 = vmax.f32 %v186, 0.0
    %v200 = vsel %vm69, %v190, %v164
    %v201 = vsel %vm69, %v191, %v166
    %v202 = vsel %vm70, %v192, %v168
    %v203 = vsel %vm70, %v193, %v170
    %v204 = vsel %vm71, %v194, %v174
    %v205 = vsel %vm71, %v195, %v176
    %v206 = vsel %vm72, %v196, %v178
    %v207 = vsel %vm72, %v197, %v180
    %v208 = vsel %vm73, %v198, %v184
    %v209 = vsel %vm73, %v199, %v186
    %v210 = vpack.c.bf16 %v202, %v200
    %v211 = vpack.c.bf16 %v203, %v201
    %v212 = vpack.c.bf16 %v206, %v204
    %v213 = vpack.c.bf16 %v207, %v205
    %v214 = vpack.c.bf16 %v208, %v208
    %v215 = vpack.c.bf16 %v209, %v209
    %v221 = vunpack.c.l.b16 %v52
    %v222 = vunpack.c.l.b16 %v53
    %v223 = vunpack.c.l.b16 %v54
    %v224 = vunpack.c.l.b16 %v55
    %v225 = vunpack.c.l.b16 %v56
    %v226 = vpack.c.b16 %v222, %v221
    %v227 = vpack.c.b16 %v224, %v223
    %v228 = vpack.c.b16 %v225, %v225
    %v230 = vsel %vm112, %v226, 0
    %v233 = vsel %vm112, %v227, 0
    %v236 = vsel %vm112, %v228, 0
    %v239 = vsel %vm122, %v214, 0
    %v242 = vsel %vm122, %v215, 0
    %244 = vmatprep.subr.bf16.mxu0 %v211
    %245 = vmatpush1.bf16.msra.mxu0 %v210
    %246 = vmatprep.subr.bf16.mxu0 %v213
    %247 = vmatpush1.bf16.msra.mxu0 %v212
    %248 = vmatprep.subr.bf16.mxu0 %v242
    %249 = vmatpush1.bf16.msra.mxu0 %v239
    %250 = vmatprep.subr.bf16.mxu0 0
    %251 = vmatpush1.bf16.msra.mxu0 0
    %252 = vmatprep.subr.bf16.mxu0 0
    %253 = vmatpush1.bf16.msra.mxu0 0
    %254 = vmatprep.subr.bf16.mxu0 0
    %255 = vmatpush1.bf16.msra.mxu0 0
    %256 = vmatprep.subr.bf16.mxu0 0
    %257 = vmatpush1.bf16.msra.mxu0 0
    %258 = vmatprep.subr.bf16.mxu0 0
    %259 = vmatpush1.bf16.msra.mxu0 0
    %260 = vmatprep.subr.bf16.mxu0 0
    %261 = vmatpush1.bf16.msra.mxu0 0
    %262 = vmatprep.subr.bf16.mxu0 0
    %263 = vmatpush1.bf16.msra.mxu0 0
    %264 = vmatprep.subr.bf16.mxu0 0
    %265 = vmatpush1.bf16.msra.mxu0 0
    %266 = vmatprep.subr.bf16.mxu0 0
    %267 = vmatpush1.bf16.msra.mxu0 0
    %268 = vmatprep.subr.bf16.mxu0 0
    %269 = vmatpush1.bf16.msra.mxu0 0
    %270 = vmatprep.subr.bf16.mxu0 0
    %271 = vmatpush1.bf16.msra.mxu0 0
    %272 = vmatprep.subr.bf16.mxu0 0
    %273 = vmatpush1.bf16.msra.mxu0 0
    %274 = vmatprep.subr.bf16.mxu0 0
    %275 = vmatpush1.bf16.msra.mxu0 0
    %276 = vmatprep.mubr.bf16.mxu0 0
    %277 = vmatmul.mubr.bf16.gmra.mrb[0].mxu0 %v230
    %v278 = vpop.f32.mrb[0].mxu0
    %v279 = vadd.f32 0.0, %v278
    %v280 = vpop.f32.mrb[0].mxu0
    %v281 = vadd.f32 0.0, %v280
    %v282 = vpop.f32.mrb[0].mxu0
    %v283 = vadd.f32 0.0, %v282
    %v284 = vpop.f32.mrb[0].mxu0
    %v285 = vadd.f32 0.0, %v284
    %286 = vmatprep.mubr.bf16.mxu0 0
    %287 = vmatmul.mubr.bf16.gmra.mrb[0].mxu0 %v233
    %v288 = vpop.f32.mrb[0].mxu0
    %v289 = vadd.f32 0.0, %v288
    %v290 = vpop.f32.mrb[0].mxu0
    %v291 = vadd.f32 0.0, %v290
    %v292 = vpop.f32.mrb[0].mxu0
    %v293 = vadd.f32 0.0, %v292
    %v294 = vpop.f32.mrb[0].mxu0
    %v295 = vadd.f32 0.0, %v294
    %296 = vmatprep.mubr.bf16.mxu0 0
    %297 = vmatmul.mubr.bf16.gmra.mrb[0].mxu0 %v236
    %v298 = vpop.f32.mrb[0].mxu0
    %v299 = vadd.f32 0.0, %v298
    %v300 = vpop.f32.mrb[0].mxu0
    %v301 = vadd.f32 0.0, %v300
    %v302 = vpop.f32.mrb[0].mxu0
    %v303 = vpop.f32.mrb[0].mxu0
    %304 = vdwg.mxu0
    %v305 = vmax.f32 %v279, 0.0
    %v306 = vmax.f32 %v281, 0.0
    %v307 = vmax.f32 %v283, 0.0
    %v308 = vmax.f32 %v285, 0.0
    %v309 = vmax.f32 %v289, 0.0
    %v310 = vmax.f32 %v291, 0.0
    %v311 = vmax.f32 %v293, 0.0
    %v312 = vmax.f32 %v295, 0.0
    %v313 = vmax.f32 %v299, 0.0
    %v314 = vmax.f32 %v301, 0.0
    %v315 = vsel %vm69, %v305, %v279
    %v316 = vsel %vm69, %v306, %v281
    %v317 = vsel %vm70, %v307, %v283
    %v318 = vsel %vm70, %v308, %v285
    %v319 = vsel %vm71, %v309, %v289
    %v320 = vsel %vm71, %v310, %v291
    %v321 = vsel %vm72, %v311, %v293
    %v322 = vsel %vm72, %v312, %v295
    %v323 = vsel %vm73, %v313, %v299
    %v324 = vsel %vm73, %v314, %v301
    %v325 = vpack.c.bf16 %v317, %v315
    %v326 = vpack.c.bf16 %v318, %v316
    %v327 = vpack.c.bf16 %v321, %v319
    %v328 = vpack.c.bf16 %v322, %v320
    %v329 = vpack.c.bf16 %v323, %v323
    %v330 = vpack.c.bf16 %v324, %v324
    %v336 = vunpack.c.l.b16 %v58
    %v337 = vunpack.c.l.b16 %v59
    %v338 = vunpack.c.l.b16 %v60
    %v339 = vunpack.c.l.b16 %v61
    %v340 = vunpack.c.l.b16 %v62
    %v341 = vpack.c.b16 %v337, %v336
    %v342 = vpack.c.b16 %v339, %v338
    %v343 = vpack.c.b16 %v340, %v340
    %v345 = vsel %vm112, %v341, 0
    %v348 = vsel %vm112, %v342, 0
    %v351 = vsel %vm112, %v343, 0
    %v354 = vsel %vm122, %v329, 0
    %v357 = vsel %vm122, %v330, 0
    %359 = vmatprep.subr.bf16.mxu0 %v326
    %360 = vmatpush1.bf16.msra.mxu0 %v325
    %361 = vmatprep.subr.bf16.mxu0 %v328
    %362 = vmatpush1.bf16.msra.mxu0 %v327
    %363 = vmatprep.subr.bf16.mxu0 %v357
    %364 = vmatpush1.bf16.msra.mxu0 %v354
    %365 = vmatprep.subr.bf16.mxu0 0
    %366 = vmatpush1.bf16.msra.mxu0 0
    %367 = vmatprep.subr.bf16.mxu0 0
    %368 = vmatpush1.bf16.msra.mxu0 0
    %369 = vmatprep.subr.bf16.mxu0 0
    %370 = vmatpush1.bf16.msra.mxu0 0
    %371 = vmatprep.subr.bf16.mxu0 0
    %372 = vmatpush1.bf16.msra.mxu0 0
    %373 = vmatprep.subr.bf16.mxu0 0
    %374 = vmatpush1.bf16.msra.mxu0 0
    %375 = vmatprep.subr.bf16.mxu0 0
    %376 = vmatpush1.bf16.msra.mxu0 0
    %377 = vmatprep.subr.bf16.mxu0 0
    %378 = vmatpush1.bf16.msra.mxu0 0
    %379 = vmatprep.subr.bf16.mxu0 0
    %380 = vmatpush1.bf16.msra.mxu0 0
    %381 = vmatprep.subr.bf16.mxu0 0
    %382 = vmatpush1.bf16.msra.mxu0 0
    %383 = vmatprep.subr.bf16.mxu0 0
    %384 = vmatpush1.bf16.msra.mxu0 0
    %385 = vmatprep.subr.bf16.mxu0 0
    %386 = vmatpush1.bf16.msra.mxu0 0
    %387 = vmatprep.subr.bf16.mxu0 0
    %388 = vmatpush1.bf16.msra.mxu0 0
    %389 = vmatprep.subr.bf16.mxu0 0
    %390 = vmatpush1.bf16.msra.mxu0 0
    %391 = vmatprep.mubr.bf16.mxu0 0
    %392 = vmatmul.mubr.bf16.gmra.mrb[0].mxu0 %v345
    %v393 = vpop.f32.mrb[0].mxu0
    %v394 = vadd.f32 0.0, %v393
    %v395 = vpop.f32.mrb[0].mxu0
    %v396 = vadd.f32 0.0, %v395
    %v397 = vpop.f32.mrb[0].mxu0
    %v398 = vpop.f32.mrb[0].mxu0
    %399 = vmatprep.mubr.bf16.mxu0 0
    %400 = vmatmul.mubr.bf16.gmra.mrb[0].mxu0 %v348
    %v401 = vpop.f32.mrb[0].mxu0
    %v402 = vpop.f32.mrb[0].mxu0
    %v403 = vpop.f32.mrb[0].mxu0
    %v404 = vpop.f32.mrb[0].mxu0
    %405 = vmatprep.mubr.bf16.mxu0 0
    %406 = vmatmul.mubr.bf16.gmra.mrb[0].mxu0 %v351
    %v407 = vpop.f32.mrb[0].mxu0
    %v408 = vpop.f32.mrb[0].mxu0
    %v409 = vpop.f32.mrb[0].mxu0
    %v410 = vpop.f32.mrb[0].mxu0
    %411 = vdwg.mxu0
    %vm412 = vcmp.lt.s32.totalorder %v64, 3
    %v413 = vxor.u32 %v394, 2147483648
    %v414 = vxor.u32 %v396, 2147483648
    %v415 = vmul.f32 %v413, 1.442695
    %v416 = vpow.pop %v415
    %v417 = vmul.f32 %v414, 1.442695
    %v418 = vpow.pop %v417
    %v419 = vadd.f32 %v416, 1.0
    %v420 = vadd.f32 %v418, 1.0
    %v421 = vrcp.pop %v419
    %v422 = vmul.f32 1.0, %v421
    %v423 = vrcp.pop %v420
    %v424 = vmul.f32 1.0, %v423
    %v425 = vsel %vm412, %v422, %v394
    %v426 = vsel %vm412, %v424, %v396
    %v429 = vcombine.low %v425, %v426
    %431 = vst [vmem:[#allocation7] sm:$0xff] %v429
    // Predicated region
    $region18: #{tpu_custom_call.1} parent=1 // pred_check
      _
    $region19: #{tpu_custom_call.1} parent=1 // pred_check_branch
      %433 = sbr.rel (0) target = $region21
    $region20: #{tpu_custom_call.1} parent=1 // pred_region
      %s435 = ssub.s32 128, 128
      %436 = vsyncadd [#allocation4], %s435
      %s438 = sshll.u32 [#allocation7], 4
      %s439 = int_to_ptr.vmem [resolvable:$true] %s438
      %441 = dma.vmem_to_hbm [thread:$0]  %s439, 128, %s2, [#allocation4]
    $region21: #{tpu_custom_call.1} parent=1 // pred_fallthru
      _
    // Predicated region
    $region22: #{tpu_custom_call.1} parent=1 // pred_check
      _
    $region23: #{tpu_custom_call.1} parent=1 // pred_check_branch
      %443 = sbr.rel (0) target = $region25
    $region24: #{tpu_custom_call.1} parent=1 // pred_region
      %444 = dma.done [#allocation4], 128
    $region25: #{tpu_custom_call.1} parent=1 // pred_fallthru
      _
    %445 = vsyncpa [#allocation3], 1
    %446 = vsyncpa [#allocation6], 1
    %447 = vsyncpa [#allocation4], 1

</llo_original>
